<compile_context>
chip_gen: v5e
topology: v5e:2x2
jax: 0.10.0
libtpu: 0.0.40
codegen_flags: <defaults>
</compile_context>

<pallas_src>
import functools

import jax
import jax.numpy as jnp
from jax.experimental import pallas as pl
from jax.experimental.pallas import tpu as pltpu

_TM_MAX = 512
_TN_MAX = 512
_TK_MAX = 1024


def _round_up(x, m):
    return (x + m - 1) // m * m


def _largest_divisor(total, align, cap):
    """Largest multiple of `align` that divides `total` and is <= cap.

    `total` must be a multiple of `align` (so `align` itself always works).
    """
    start = (min(cap, total) // align) * align
    d = start
    while d >= align:
        if total % d == 0:
            return d
        d -= align
    return align


def encoder_one_layer_kernel(x_ref, w_ref, bsb_ref, o_ref):
    """out = sigmoid(x @ w_eff + b) - sigmoid(b); (1-p) already folded into w_eff.

    Grid = (M tiles, N tiles, K tiles).  The K (reduction) axis is last; the
    f32 output tile itself is the accumulator (same block index for every k).
    bsb_ref row 0 = bias, row 1 = sigmoid(bias).
    """
    k = pl.program_id(2)

    @pl.when(k == 0)
    def _():
        o_ref[...] = jnp.zeros_like(o_ref)

    o_ref[...] += jnp.dot(x_ref[...], w_ref[...],
                          preferred_element_type=jnp.float32)

    @pl.when(k == pl.num_programs(2) - 1)
    def _():
        z = o_ref[...] + bsb_ref[0:1, :]            # bias, broadcast over rows
        o_ref[...] = jax.nn.sigmoid(z) - bsb_ref[1:2, :]   # precomputed sigmoid(b)


def fold_and_pad_params(p, w, b):
    """One-time parameter setup (run once at load time, NOT per forward call).

    * Folds eval-mode `x * (1 - p)` into the weight: w_eff = (1 - p)[:, None] * w
    * Pads F_in / F_emb up to the 128-lane boundary only (tiles are later
      chosen as divisors of these padded extents -> no extra padding).
    * Stores the folded weight in bfloat16 for MXU throughput.
    * Packs [bias; sigmoid(bias)] into one (2, n_pad) f32 array.
    """
    f_in, f_emb = w.shape
    k_pad = _round_up(f_in, 128)
    n_pad = _round_up(f_emb, 128)

    w_eff = (1.0 - p.astype(jnp.float32))[:, None] * w.astype(jnp.float32)
    w_eff = jnp.pad(w_eff, ((0, k_pad - f_in), (0, n_pad - f_emb)))
    w_eff = w_eff.astype(jnp.bfloat16)

    b_pad = jnp.pad(b.astype(jnp.float32), (0, n_pad - f_emb))
    bsb = jnp.stack([b_pad, jax.nn.sigmoid(b_pad)], axis=0)   # (2, n_pad) f32
    return w_eff, bsb


@functools.partial(jax.jit, static_argnames=("f_emb",))
def encoder_one_layer(x, w_eff, bsb, *, f_emb):
    """Eval-mode forward of EncoderOneLayer using pre-folded / padded params."""
    batch, f_in = x.shape
    k_pad, n_pad = w_eff.shape

    # Tiles are divisors of the (minimally) padded extents -> no wasted work.
    tn = _largest_divisor(n_pad, 128, _TN_MAX)
    tk = _largest_divisor(k_pad, 128, _TK_MAX)
    m_pad = _round_up(batch, 8)
    tm = _largest_divisor(m_pad, 8, _TM_MAX)
    # If the parallel grid would be a single (1, 1) tile, split M so v7x's
    # two TensorCores both get work (no effect on single-TC v5e/v6e).
    if (m_pad // tm) == 1 and (n_pad // tn) == 1 and m_pad >= 16:
        tm = _largest_divisor(m_pad, 8, m_pad // 2)

    # Pad activations: batch -> 8 sublanes, f_in -> 128 lanes; cast to bf16.
    x_p = jnp.pad(x.astype(jnp.float32),
                  ((0, m_pad - batch), (0, k_pad - f_in))).astype(jnp.bfloat16)

    grid = (m_pad // tm, n_pad // tn, k_pad // tk)

    out_pad = pl.pallas_call(
        encoder_one_layer_kernel,
        out_shape=jax.ShapeDtypeStruct((m_pad, n_pad), jnp.float32),
        grid_spec=pltpu.PrefetchScalarGridSpec(
            num_scalar_prefetch=0,
            grid=grid,
            in_specs=[
                pl.BlockSpec((tm, tk), lambda i, j, k: (i, k)),   # x tile (bf16)
                pl.BlockSpec((tk, tn), lambda i, j, k: (k, j)),   # w_eff tile (bf16)
                pl.BlockSpec((2, tn), lambda i, j, k: (0, j)),    # [bias; sigmoid(bias)]
            ],
            out_specs=pl.BlockSpec((tm, tn), lambda i, j, k: (i, j)),
        ),
        compiler_params=pltpu.CompilerParams(
            dimension_semantics=("parallel", "parallel", "arbitrary"),
            vmem_limit_bytes=32 * 1024 * 1024,
        ),
        cost_estimate=pl.CostEstimate(
            flops=2 * m_pad * k_pad * n_pad,
            transcendentals=m_pad * n_pad,
            bytes_accessed=(2 * (m_pad * k_pad + k_pad * n_pad)     # bf16 inputs
                            + 4 * (2 * n_pad + m_pad * n_pad)),     # f32 bias/out
        ),
    )(x_p, w_eff, bsb)

    return out_pad[:batch, :f_emb]


def reference(x, p, w, b):
    xp = x * (1.0 - p)
    z = jnp.dot(xp, w, precision=jax.lax.Precision.HIGHEST) + b
    return jax.nn.sigmoid(z) - jax.nn.sigmoid(b)


def _run_case(key, batch, in_features, embedding_features):
    kx, kp, kw, kb = jax.random.split(key, 4)
    x = jax.random.normal(kx, (batch, in_features), dtype=jnp.float32)
    p = jax.random.uniform(kp, (in_features,), dtype=jnp.float32)
    bound = 1.0 / jnp.sqrt(in_features)
    w = jax.random.uniform(kw, (in_features, embedding_features),
                           dtype=jnp.float32, minval=-bound, maxval=bound)
    b = jax.random.uniform(kb, (embedding_features,), dtype=jnp.float32,
                           minval=-bound, maxval=bound)

    # One-time parameter setup (folding + padding + bf16 cast), amortized
    # across all subsequent forward calls.
    w_eff, bsb = fold_and_pad_params(p, w, b)

    out = encoder_one_layer(x, w_eff, bsb, f_emb=embedding_features)
    out = jax.block_until_ready(out)

    ref = reference(x, p, w, b)
    assert out.shape == (batch, embedding_features)
    # bf16 operands on the MXU (f32 accumulation) -> looser tolerance than a
    # pure-f32 HIGHEST-precision reference.
    assert jnp.allclose(out, ref, atol=1e-2, rtol=1e-2), "mismatch vs reference"


if __name__ == "__main__":
    key = jax.random.PRNGKey(0)
    k1, k2 = jax.random.split(key, 2)

    # Small shapes matching the original module's typical use (8 x 32 -> 16).
    # At these shapes any standalone kernel is launch-overhead bound; in
    # production this op should be fused into the surrounding graph.
    _run_case(k1, batch=8, in_features=32, embedding_features=16)

    # Larger shapes: K stays 640 (single K step, no 1024-padding), batch 300
    # pads only to 304 and splits into two M tiles (304 = 2 x 152) so both
    # v7x TensorCores get work.
    _run_case(k2, batch=300, in_features=640, embedding_features=256)

    # TODO(synk): training-mode path uses torch.rand_like per-element scaling;
    # only the eval path (p_const buffer, folded into the weight) is implemented.
    print("KERNEL_OK")
</pallas_src>

<mosaic_0001>
module attributes {stable_mosaic.version = 11 : i64} {
  func.func @encoder_one_layer_kernel(%arg0: i32, %arg1: i32, %arg2: i32, %arg3: memref<8x128xbf16, #tpu.memory_space<vmem>>, %arg4: memref<128x128xbf16, #tpu.memory_space<vmem>>, %arg5: memref<2x128xf32, #tpu.memory_space<vmem>>, %arg6: memref<8x128xf32, #tpu.memory_space<vmem>>) attributes {dimension_semantics = [#tpu.dimension_semantics<parallel>, #tpu.dimension_semantics<parallel>, #tpu.dimension_semantics<arbitrary>], iteration_bounds = array<i64: 1, 1, 1>, scalar_prefetch = 0 : i64, scratch_operands = 0 : i64, tpu.core_type = #tpu.core_type<tc>, window_params = [{transform_indices = @transform_0, window_bounds = array<i64: 8, 128>}, {transform_indices = @transform_1, window_bounds = array<i64: 128, 128>}, {transform_indices = @transform_2, window_bounds = array<i64: 2, 128>}, {transform_indices = @transform_3, window_bounds = array<i64: 8, 128>}]} {
    %c0_i32 = arith.constant 0 : i32
    %0 = arith.cmpi eq, %arg2, %c0_i32 : i32
    %1 = arith.extui %0 : i1 to i32
    %c0_i32_0 = arith.constant 0 : i32
    %2 = arith.cmpi ne, %1, %c0_i32_0 : i32
    scf.if %2 {
      %cst_10 = arith.constant 0.000000e+00 : f32
      %12 = vector.broadcast %cst_10 : f32 to vector<8x128xf32>
      %c0_11 = arith.constant 0 : index
      %c0_12 = arith.constant 0 : index
      %13 = vector.load %arg6[%c0_11, %c0_12] : memref<8x128xf32, #tpu.memory_space<vmem>>, vector<8x128xf32>
      tpu.vector_store %arg6[%c0_11, %c0_12], %12 {strides = array<i32>} : memref<8x128xf32, #tpu.memory_space<vmem>>, vector<8x128xf32>,
    } else {
    }
    %c0 = arith.constant 0 : index
    %c0_1 = arith.constant 0 : index
    %3 = vector.load %arg6[%c0, %c0_1] : memref<8x128xf32, #tpu.memory_space<vmem>>, vector<8x128xf32>
    %c0_2 = arith.constant 0 : index
    %c0_3 = arith.constant 0 : index
    %4 = vector.load %arg3[%c0_2, %c0_3] : memref<8x128xbf16, #tpu.memory_space<vmem>>, vector<8x128xbf16>
    %c0_4 = arith.constant 0 : index
    %c0_5 = arith.constant 0 : index
    %5 = vector.load %arg4[%c0_4, %c0_5] : memref<128x128xbf16, #tpu.memory_space<vmem>>, vector<128x128xbf16>
    %cst = arith.constant dense<0.000000e+00> : vector<8x128xf32>
    %6 = tpu.matmul %4, %5, %cst {dimension_numbers = #tpu.dot_dimension_numbers<[1], [0], [0], [1], [0, 0, 1, 1], [], []>} : vector<8x128xbf16>, vector<128x128xbf16>, vector<8x128xf32> -> vector<8x128xf32>
    %7 = arith.addf %3, %6 : vector<8x128xf32>
    %c0_6 = arith.constant 0 : index
    %c0_7 = arith.constant 0 : index
    %8 = vector.load %arg6[%c0_6, %c0_7] : memref<8x128xf32, #tpu.memory_space<vmem>>, vector<8x128xf32>
    tpu.vector_store %arg6[%c0_6, %c0_7], %7 {strides = array<i32>} : memref<8x128xf32, #tpu.memory_space<vmem>>, vector<8x128xf32>,
    %c0_i32_8 = arith.constant 0 : i32
    %9 = arith.cmpi eq, %arg2, %c0_i32_8 : i32
    %10 = arith.extui %9 : i1 to i32
    %c0_i32_9 = arith.constant 0 : i32
    %11 = arith.cmpi ne, %10, %c0_i32_9 : i32
    scf.if %11 {
      %c0_10 = arith.constant 0 : index
      %c0_11 = arith.constant 0 : index
      %12 = vector.load %arg6[%c0_10, %c0_11] : memref<8x128xf32, #tpu.memory_space<vmem>>, vector<8x128xf32>
      %c0_12 = arith.constant 0 : index
      %c0_13 = arith.constant 0 : index
      %13 = vector.load %arg5[%c0_12, %c0_13] : memref<2x128xf32, #tpu.memory_space<vmem>>, vector<1x128xf32>
      %14 = vector.broadcast %13 : vector<1x128xf32> to vector<8x128xf32>
      %15 = arith.addf %12, %14 : vector<8x128xf32>
      %16 = arith.negf %15 : vector<8x128xf32>
      %17 = math.exp %16 : vector<8x128xf32>
      %cst_14 = arith.constant 1.000000e+00 : f32
      %18 = vector.broadcast %cst_14 : f32 to vector<8x128xf32>
      %19 = arith.addf %18, %17 : vector<8x128xf32>
      %20 = arith.divf %18, %19 : vector<8x128xf32>
      %c1 = arith.constant 1 : index
      %c0_15 = arith.constant 0 : index
      %21 = vector.load %arg5[%c1, %c0_15] : memref<2x128xf32, #tpu.memory_space<vmem>>, vector<1x128xf32>
      %22 = vector.broadcast %21 : vector<1x128xf32> to vector<8x128xf32>
      %23 = arith.subf %20, %22 : vector<8x128xf32>
      %c0_16 = arith.constant 0 : index
      %c0_17 = arith.constant 0 : index
      %24 = vector.load %arg6[%c0_16, %c0_17] : memref<8x128xf32, #tpu.memory_space<vmem>>, vector<8x128xf32>
      tpu.vector_store %arg6[%c0_16, %c0_17], %23 {strides = array<i32>} : memref<8x128xf32, #tpu.memory_space<vmem>>, vector<8x128xf32>,
    } else {
    }
    return
  }
  func.func @transform_0(%arg0: i32, %arg1: i32, %arg2: i32) -> (i32, i32) {
    %c0_i32 = arith.constant 0 : i32
    return %arg0, %arg2 : i32, i32
  }
  func.func @transform_1(%arg0: i32, %arg1: i32, %arg2: i32) -> (i32, i32) {
    %c0_i32 = arith.constant 0 : i32
    return %arg2, %arg1 : i32, i32
  }
  func.func @transform_2(%arg0: i32, %arg1: i32, %arg2: i32) -> (i32, i32) {
    %c0_i32 = arith.constant 0 : i32
    %c0_i32_0 = arith.constant 0 : i32
    return %c0_i32, %arg1 : i32, i32
  }
  func.func @transform_3(%arg0: i32, %arg1: i32, %arg2: i32) -> (i32, i32) {
    %c0_i32 = arith.constant 0 : i32
    return %arg0, %arg1 : i32, i32
  }
}

</mosaic_0001>

<llo_original>
// kernel: encoder_one_layer.1
$region0: #{encoder_one_layer.1}
  #allocation0 [shape = 'u32[]', space=smem, size = 0x4, offset = 0x4, fixed_abs, tag = 'smem constant byte address 0x4 - core index']
  #allocation1 [shape = 'u32[72,128]{1,0:T(1,128)}', space=vmem, size = 0x9000, scoped, tag = 'internal scratch']
  %s0 = inlined_call_operand.vmem [shape: bf16[8,128], index: 0, kind: input, shape index: {}]
  %s1 = inlined_call_operand.hbm [shape: bf16[128,128], index: 1, kind: input, shape index: {}]
  %s2 = inlined_call_operand.vmem [shape: f32[2,128], index: 2, kind: input, shape index: {}]
  %s3 = inlined_call_operand.hbm [shape: f32[8,128], index: 3, kind: output, shape index: {}]
  %s4 = sld [smem:[#allocation0]]
  $region34: #{encoder_one_layer.1} parent=0
    _
  %s6 = ssub.s32 1, %s4
  %s7 = scalar_select 0, %s6, %s4
  $region1: #{encoder_one_layer.1} parent=0
    #allocation2 [shape = 'u8[32768]{0}', space=vmem, size = 0x8000, scoped, tag = 'input window, operand 1, single buffered']
    #allocation3 [shape = 's32[1]{0}', space=sflag, size = 0x4, scoped, tag = 'scoped memory for encoder_one_layer.1']
    #allocation4 [shape = 's32[1]{0}', space=sflag, size = 0x4, scoped, tag = 'scoped memory for encoder_one_layer.1']
    #allocation5 [shape = 'u8[4096]{0}', space=vmem, size = 0x1000, scoped, tag = 'output window, operand 0, single buffered']
    %8 = vsyncpa [#allocation3], 0
    %9 = vsyncpa [#allocation4], 0
    // Predicated region
    $region2: #{encoder_one_layer.1} parent=1 // pred_check
      _
    $region3: #{encoder_one_layer.1} parent=1 // pred_check_branch
      %11 = sbr.rel (0) target = $region5
    $region4: #{encoder_one_layer.1} parent=1 // pred_region
      _
    $region5: #{encoder_one_layer.1} parent=1 // pred_fallthru
      _
    // Predicated region
    $region6: #{encoder_one_layer.1} parent=1 // pred_check
      _
    $region7: #{encoder_one_layer.1} parent=1 // pred_check_branch
      %13 = sbr.rel (0) target = $region9
    $region8: #{encoder_one_layer.1} parent=1 // pred_region
      %15 = vsyncadd [#allocation3], 0
      %s16 = sshll.u32 %s1, 4
      %s17 = int_to_ptr.hbm [resolvable:$true] %s16
      %s18 = sshll.u32 [#allocation2], 4
      %s19 = int_to_ptr.vmem [resolvable:$true] %s18
      %24 = dma.hbm_to_vmem [thread:$0]  %s17, 1024, %s19, [#allocation3], 64, 64, 4
    $region9: #{encoder_one_layer.1} parent=1 // pred_fallthru
      _
    // Predicated region
    $region10: #{encoder_one_layer.1} parent=1 // pred_check
      _
    $region11: #{encoder_one_layer.1} parent=1 // pred_check_branch
      %26 = sbr.rel (0) target = $region13
    $region12: #{encoder_one_layer.1} parent=1 // pred_region
      _
    $region13: #{encoder_one_layer.1} parent=1 // pred_fallthru
      _
    // Predicated region
    $region14: #{encoder_one_layer.1} parent=1 // pred_check
      _
    $region15: #{encoder_one_layer.1} parent=1 // pred_check_branch
      %28 = sbr.rel (0) target = $region17
    $region16: #{encoder_one_layer.1} parent=1 // pred_region
      %30 = dma.done [#allocation3], 1024
    $region17: #{encoder_one_layer.1} parent=1 // pred_fallthru
      _
    %p31 = scmp.eq.s32.totalorder 0, 0
    // Predicated region
    $region18: #{encoder_one_layer.1} parent=1 // pred_check
      %p32 = pneg %p31
    $region19: #{encoder_one_layer.1} parent=1 // pred_check_branch
      %34 = sbr.rel (%p32) target = $region21
    $region20: #{encoder_one_layer.1} parent=1 // pred_region
      %35 = vst [vmem:[#allocation5] sm:$0xff] 0.0
    $region21: #{encoder_one_layer.1} parent=1 // pred_fallthru
      _
    %v36 = vld [vmem:[#allocation5] sm:$0xff]
    %v37 = vld [vmem:[%s0] sm:$0xf]
    %v38 = vld [vmem:[#allocation2] sm:$0xf]
    %v39 = vld [vmem:[#allocation2 + $0x4] sm:$0xf]
    %v40 = vld [vmem:[#allocation2 + $0x8] sm:$0xf]
    %v41 = vld [vmem:[#allocation2 + $0xc] sm:$0xf]
    %v42 = vld [vmem:[#allocation2 + $0x10] sm:$0xf]
    %v43 = vld [vmem:[#allocation2 + $0x14] sm:$0xf]
    %v44 = vld [vmem:[#allocation2 + $0x18] sm:$0xf]
    %v45 = vld [vmem:[#allocation2 + $0x1c] sm:$0xf]
    %v46 = vld [vmem:[#allocation2 + $0x20] sm:$0xf]
    %v47 = vld [vmem:[#allocation2 + $0x24] sm:$0xf]
    %v48 = vld [vmem:[#allocation2 + $0x28] sm:$0xf]
    %v49 = vld [vmem:[#allocation2 + $0x2c] sm:$0xf]
    %v50 = vld [vmem:[#allocation2 + $0x30] sm:$0xf]
    %v51 = vld [vmem:[#allocation2 + $0x34] sm:$0xf]
    %v52 = vld [vmem:[#allocation2 + $0x38] sm:$0xf]
    %v53 = vld [vmem:[#allocation2 + $0x3c] sm:$0xf]
    %v70 = vunpack.c.l.b16 %v38
    %v71 = vunpack.c.l.b16 %v39
    %v72 = vunpack.c.l.b16 %v40
    %v73 = vunpack.c.l.b16 %v41
    %v74 = vunpack.c.l.b16 %v42
    %v75 = vunpack.c.l.b16 %v43
    %v76 = vunpack.c.l.b16 %v44
    %v77 = vunpack.c.l.b16 %v45
    %v78 = vunpack.c.l.b16 %v46
    %v79 = vunpack.c.l.b16 %v47
    %v80 = vunpack.c.l.b16 %v48
    %v81 = vunpack.c.l.b16 %v49
    %v82 = vunpack.c.l.b16 %v50
    %v83 = vunpack.c.l.b16 %v51
    %v84 = vunpack.c.l.b16 %v52
    %v85 = vunpack.c.l.b16 %v53
    %v86 = vpack.c.b16 %v71, %v70
    %v87 = vpack.c.b16 %v73, %v72
    %v88 = vpack.c.b16 %v75, %v74
    %v89 = vpack.c.b16 %v77, %v76
    %v90 = vpack.c.b16 %v79, %v78
    %v91 = vpack.c.b16 %v81, %v80
    %v92 = vpack.c.b16 %v83, %v82
    %v93 = vpack.c.b16 %v85, %v84
    %102 = vmatpush.bf16.msra.mxu0 %v93
    %103 = vmatpush.bf16.msra.mxu0 %v92
    %104 = vmatpush.bf16.msra.mxu0 %v91
    %105 = vmatpush.bf16.msra.mxu0 %v90
    %106 = vmatpush.bf16.msra.mxu0 %v89
    %107 = vmatpush.bf16.msra.mxu0 %v88
    %108 = vmatpush.bf16.msra.mxu0 %v87
    %109 = vmatpush.bf16.msra.mxu0 %v86
    %110 = vmatmul.bf16.gmra.mxu0 %v37
    %v111 = vpop.f32.mrf.mxu0
    %v112 = vadd.f32 0.0, %v111
    %v113 = vpop.f32.mrf.mxu0
    %114 = vdwg.mxu0
    %v115 = vadd.f32 %v36, %v112
    %116 = vst [vmem:[#allocation5] sm:$0xff] %v115
    // Predicated region
    $region22: #{encoder_one_layer.1} parent=1 // pred_check
      %p117 = pneg %p31
    $region23: #{encoder_one_layer.1} parent=1 // pred_check_branch
      %119 = sbr.rel (%p117) target = $region25
    $region24: #{encoder_one_layer.1} parent=1 // pred_region
      %v120 = vld [vmem:[#allocation5] sm:$0xff]
      %v121 = vld [vmem:[%s2] sm:$0x1]
      %v122 = vperm.slane %v121, 0
      %v123 = vadd.f32 %v120, %v122
      %v124 = vxor.u32 %v123, 2147483648
      %v125 = vmul.f32 %v124, 1.442695
      %v126 = vpow.pop %v125
      %v127 = vadd.f32 %v126, 1.0
      %v128 = vrcp.pop %v127
      %v129 = vmul.f32 %v127, %v128
      %v130 = vsub.f32 1.0, %v129
      %v131 = vmul.f32 %v128, %v130
      %v132 = vadd.f32 %v128, %v131
      %vm133 = vweird.f32 %v127
      %vm134 = vweird.f32 %v128
      %vm135 = vmor %vm133, %vm134
      %v136 = vsel %vm135, %v128, %v132
      %v137 = vand.u32 2147483647, %v127
      %vm138 = vcmp.eq.f32.partialorder %v137, 8.507059e+37
      %v139 = vand.u32 %v127, 2147483648
      %v140 = vor.u32 1.1754944e-38, %v139
      %v141 = vsel %vm138, %v140, %v136
      %v142 = vmul.f32 1.0, %v141
      %v143 = vld [vmem:[%s2 + $0x1] sm:$0x1]
      %v144 = vperm.slane %v143, 0
      %v145 = vsub.f32 %v142, %v144
      %146 = vst [vmem:[#allocation5] sm:$0xff] %v145
    $region25: #{encoder_one_layer.1} parent=1 // pred_fallthru
      _
    // Predicated region
    $region26: #{encoder_one_layer.1} parent=1 // pred_check
      _
    $region27: #{encoder_one_layer.1} parent=1 // pred_check_branch
      %148 = sbr.rel (0) target = $region29
    $region28: #{encoder_one_layer.1} parent=1 // pred_region
      %150 = vsyncadd [#allocation4], 0
      %s152 = sshll.u32 [#allocation5], 4
      %s153 = int_to_ptr.vmem [resolvable:$true] %s152
      %s154 = sshll.u32 %s3, 4
      %s155 = int_to_ptr.hbm [resolvable:$true] %s154
      %157 = dma.vmem_to_hbm [thread:$0]  %s153, 128, %s155, [#allocation4]
    $region29: #{encoder_one_layer.1} parent=1 // pred_fallthru
      _
    // Predicated region
    $region30: #{encoder_one_layer.1} parent=1 // pred_check
      _
    $region31: #{encoder_one_layer.1} parent=1 // pred_check_branch
      %159 = sbr.rel (0) target = $region33
    $region32: #{encoder_one_layer.1} parent=1 // pred_region
      %161 = dma.done [#allocation4], 128
    $region33: #{encoder_one_layer.1} parent=1 // pred_fallthru
      _
    %162 = vsyncpa [#allocation3], 1
    %163 = vsyncpa [#allocation4], 1

</llo_original>
